<compile_context>
chip_gen: v7x
topology: tpu7x:2x2x1
jax: 0.10.0
libtpu: 0.0.40
codegen_flags: <defaults>
</compile_context>

<pallas_src>
import functools

import jax
import jax.numpy as jnp
from jax.experimental import pallas as pl
from jax.experimental.pallas import tpu as pltpu


def _round_up(x, m):
    return (x + m - 1) // m * m


# ---------------------------------------------------------------------------
# Kernel 1: tiled segment-sum pool over the node dimension.
# grid = (D_pad // tile_d, N_pad // tile_n)
#   axis 0 ("parallel")  : feature-column tiles -> megacore-shardable (v7x)
#   axis 1 ("arbitrary") : reduction over node tiles; the output block is resident
#                          across this axis and doubles as the f32 accumulator.
# ---------------------------------------------------------------------------
def _segment_sum_kernel(batch_ref, embed_ref, out_ref):
    n_step = pl.program_id(1)

    @pl.when(n_step == 0)
    def _init():
        out_ref[...] = jnp.zeros_like(out_ref)

    # Per-tile one-hot membership mask [B_pad, tile_n], built on the VPU from the
    # int32 graph ids.  Padding nodes carry id -1 and never match any graph row.
    batch_tile = batch_ref[...]                                   # [1, tile_n] int32
    b_pad = out_ref.shape[0]
    tile_n = batch_tile.shape[1]
    graph_ids = jax.lax.broadcasted_iota(jnp.int32, (b_pad, tile_n), 0)
    onehot = (graph_ids == batch_tile).astype(jnp.float32)        # [B_pad, tile_n]

    # Segment-sum of this (node tile, feature tile) block on the MXU; f32 accumulate.
    out_ref[...] += jnp.dot(onehot, embed_ref[...],
                            preferred_element_type=jnp.float32)   # [B_pad, tile_d]


# ---------------------------------------------------------------------------
# Kernel 2: one-shot head.  mean-scale -> fc1 -> ReLU -> (eval dropout) -> fc2.
# ---------------------------------------------------------------------------
def _mlp_head_kernel(sums_ref, inv_cnt_ref, w1_ref, b1_ref, w2_ref, b2_ref, out_ref):
    pooled = sums_ref[...] * inv_cnt_ref[...]                     # global mean pool
    h = jnp.dot(pooled, w1_ref[...], preferred_element_type=jnp.float32) + b1_ref[...]
    h = jnp.maximum(h, 0.0)                                       # ReLU
    # dropout(p=0.5, training=False) == identity in eval mode.
    out = jnp.dot(h, w2_ref[...], preferred_element_type=jnp.float32) + b2_ref[...]
    out_ref[...] = out.astype(out_ref.dtype)


@functools.partial(jax.jit, static_argnames=("num_graphs", "tile_n", "tile_d"))
def sact_head_forward(embed, batch, params, num_graphs, tile_n=2048, tile_d=128):
    """embed: [N, D] f32, batch: [N] int32 graph id per node -> [num_graphs, C]."""
    N, D = embed.shape
    w1, b1, w2, b2 = params
    C = w2.shape[1]

    # ---- wrapper-side padding / glue (cheap XLA setup, not the hot path) ----------
    D_pad = _round_up(D, 128)
    C_pad = _round_up(C, 128)
    B_pad = _round_up(num_graphs, 8)

    # Force lane-aligned tiles regardless of caller-supplied values.
    tile_d = max(128, _round_up(tile_d, 128))
    if D_pad % tile_d != 0:
        tile_d = 128                                  # 128 always divides D_pad
    tile_n = max(128, _round_up(tile_n, 128))
    tile_n_eff = min(tile_n, _round_up(N, 128))
    N_pad = _round_up(N, tile_n_eff)
    n_n_tiles = N_pad // tile_n_eff
    n_d_tiles = D_pad // tile_d

    embed_p = jnp.pad(embed, ((0, N_pad - N), (0, D_pad - D)))
    # Padding nodes get graph id -1 -> never match any one-hot row.
    batch_p = jnp.pad(batch.astype(jnp.int32), (0, N_pad - N),
                      constant_values=-1).reshape(1, N_pad)

    counts = jnp.bincount(batch, length=num_graphs).astype(jnp.float32)
    inv_counts = 1.0 / jnp.maximum(counts, 1.0)
    inv_counts = jnp.pad(inv_counts, (0, B_pad - num_graphs),
                         constant_values=1.0).reshape(B_pad, 1)

    w1_p = jnp.pad(w1, ((0, D_pad - D), (0, D_pad - D)))
    b1_p = jnp.pad(b1, (0, D_pad - D)).reshape(1, D_pad)
    w2_p = jnp.pad(w2, ((0, D_pad - D), (0, C_pad - C)))
    b2_p = jnp.pad(b2, (0, C_pad - C)).reshape(1, C_pad)

    # ---- Kernel 1: streaming segment-sum over node tiles --------------------------
    sums = pl.pallas_call(
        _segment_sum_kernel,
        out_shape=jax.ShapeDtypeStruct((B_pad, D_pad), jnp.float32),
        grid=(n_d_tiles, n_n_tiles),
        in_specs=[
            pl.BlockSpec((1, tile_n_eff), lambda j, i: (0, i)),        # graph ids tile
            pl.BlockSpec((tile_n_eff, tile_d), lambda j, i: (i, j)),   # embed tile
        ],
        out_specs=pl.BlockSpec((B_pad, tile_d), lambda j, i: (0, j)),  # resident acc
        compiler_params=pltpu.CompilerParams(
            dimension_semantics=("parallel", "arbitrary"),   # D tiles parallel, N reduction
            vmem_limit_bytes=32 * 1024 * 1024,               # explicit budget (v7x-safe)
        ),
    )(batch_p, embed_p)

    # ---- Kernel 2: one-shot mean-scale + fc1 -> ReLU -> fc2 ------------------------
    out_full = pl.pallas_call(
        _mlp_head_kernel,
        out_shape=jax.ShapeDtypeStruct((B_pad, C_pad), jnp.float32),
        grid=(1,),
        in_specs=[
            pl.BlockSpec((B_pad, D_pad), lambda i: (0, 0)),   # pooled sums
            pl.BlockSpec((B_pad, 1), lambda i: (0, 0)),       # inverse counts
            pl.BlockSpec((D_pad, D_pad), lambda i: (0, 0)),   # w1
            pl.BlockSpec((1, D_pad), lambda i: (0, 0)),       # b1
            pl.BlockSpec((D_pad, C_pad), lambda i: (0, 0)),   # w2
            pl.BlockSpec((1, C_pad), lambda i: (0, 0)),       # b2
        ],
        out_specs=pl.BlockSpec((B_pad, C_pad), lambda i: (0, 0)),
        compiler_params=pltpu.CompilerParams(
            dimension_semantics=("arbitrary",),
            vmem_limit_bytes=32 * 1024 * 1024,
        ),
    )(sums, inv_counts, w1_p, b1_p, w2_p, b2_p)

    return out_full[:num_graphs, :C]


def _reference_forward(embed, batch, params, num_graphs):
    w1, b1, w2, b2 = params
    onehot = (batch[None, :] == jnp.arange(num_graphs)[:, None]).astype(jnp.float32)
    pooled = (onehot @ embed) / jnp.maximum(onehot.sum(-1, keepdims=True), 1.0)
    h = jnp.maximum(pooled @ w1 + b1, 0.0)
    return h @ w2 + b2


if __name__ == "__main__":
    key = jax.random.PRNGKey(0)
    N, D, C, B = 16, 32, 5, 2   # N nodes, feature dim, num_classes, num graphs

    k1, k2, k3, k4, k5 = jax.random.split(key, 5)
    embed = jax.random.normal(k1, (N, D), dtype=jnp.float32)
    batch = jnp.repeat(jnp.arange(B, dtype=jnp.int32), N // B)  # [N], sorted graph ids

    # PyTorch-Linear-style uniform init: U(-1/sqrt(fan_in), 1/sqrt(fan_in))
    lim1 = float(1.0 / jnp.sqrt(D))
    w1 = jax.random.uniform(k2, (D, D), minval=-lim1, maxval=lim1, dtype=jnp.float32)
    b1 = jax.random.uniform(k3, (D,), minval=-lim1, maxval=lim1, dtype=jnp.float32)
    w2 = jax.random.uniform(k4, (D, C), minval=-lim1, maxval=lim1, dtype=jnp.float32)
    b2 = jax.random.uniform(k5, (C,), minval=-lim1, maxval=lim1, dtype=jnp.float32)
    params = (w1, b1, w2, b2)

    out = sact_head_forward(embed, batch, params, B)
    out = jax.block_until_ready(out)

    ref = _reference_forward(embed, batch, params, B)
    assert out.shape == (B, C)
    assert jnp.allclose(out, ref, atol=1e-5, rtol=1e-5)

    print("KERNEL_OK")
</pallas_src>

<mosaic_0001>
module attributes {stable_mosaic.version = 11 : i64} {
  func.func private @main(%arg0: i32) attributes {dimension_semantics = [#tpu.dimension_semantics<core_parallel>], iteration_bounds = array<i64: 2>, tpu.core_type = #tpu.core_type<sc_scalar_subcore>, window_params = []} {
    return
  }
}

module attributes {stable_mosaic.version = 11 : i64} {
  func.func private @main(%arg0: i32) attributes {dimension_semantics = [#tpu.dimension_semantics<core_parallel>], iteration_bounds = array<i64: 2>, tpu.core_type = #tpu.core_type<sc_scalar_subcore>, window_params = []} {
    return
  }
}

module attributes {stable_mosaic.version = 11 : i64} {
  func.func @_segment_sum_kernel(%arg0: i32, %arg1: i32, %arg2: memref<1x128xi32, #tpu.memory_space<vmem>>, %arg3: memref<128x128xf32, #tpu.memory_space<vmem>>, %arg4: memref<8x128xf32, #tpu.memory_space<vmem>>) attributes {dimension_semantics = [#tpu.dimension_semantics<parallel>, #tpu.dimension_semantics<arbitrary>], iteration_bounds = array<i64: 1, 1>, scalar_prefetch = 0 : i64, scratch_operands = 0 : i64, tpu.core_type = #tpu.core_type<tc>, window_params = [{transform_indices = @transform_0, window_bounds = array<i64: 1, 128>}, {transform_indices = @transform_1, window_bounds = array<i64: 128, 128>}, {transform_indices = @transform_2, window_bounds = array<i64: 8, 128>}]} {
    %c0_i32 = arith.constant 0 : i32
    %0 = arith.cmpi eq, %arg1, %c0_i32 : i32
    %1 = arith.extui %0 : i1 to i32
    %c0_i32_0 = arith.constant 0 : i32
    %2 = arith.cmpi ne, %1, %c0_i32_0 : i32
    scf.if %2 {
      %cst_8 = arith.constant 0.000000e+00 : f32
      %14 = vector.broadcast %cst_8 : f32 to vector<8x128xf32>
      %c0_9 = arith.constant 0 : index
      %c0_10 = arith.constant 0 : index
      %15 = vector.load %arg4[%c0_9, %c0_10] : memref<8x128xf32, #tpu.memory_space<vmem>>, vector<8x128xf32>
      tpu.vector_store %arg4[%c0_9, %c0_10], %14 {strides = array<i32>} : memref<8x128xf32, #tpu.memory_space<vmem>>, vector<8x128xf32>,
    } else {
    }
    %c0 = arith.constant 0 : index
    %c0_1 = arith.constant 0 : index
    %3 = vector.load %arg2[%c0, %c0_1] : memref<1x128xi32, #tpu.memory_space<vmem>>, vector<1x128xi32>
    %4 = tpu.iota {dimensions = array<i32: 0>} : vector<8x128xi32>
    %5 = vector.broadcast %3 : vector<1x128xi32> to vector<8x128xi32>
    %6 = arith.cmpi eq, %4, %5 : vector<8x128xi32>
    %7 = arith.extui %6 : vector<8x128xi1> to vector<8x128xi32>
    %8 = arith.sitofp %7 : vector<8x128xi32> to vector<8x128xf32>
    %c0_2 = arith.constant 0 : index
    %c0_3 = arith.constant 0 : index
    %9 = vector.load %arg4[%c0_2, %c0_3] : memref<8x128xf32, #tpu.memory_space<vmem>>, vector<8x128xf32>
    %c0_4 = arith.constant 0 : index
    %c0_5 = arith.constant 0 : index
    %10 = vector.load %arg3[%c0_4, %c0_5] : memref<128x128xf32, #tpu.memory_space<vmem>>, vector<128x128xf32>
    %cst = arith.constant dense<0.000000e+00> : vector<8x128xf32>
    %11 = tpu.matmul %8, %10, %cst {dimension_numbers = #tpu.dot_dimension_numbers<[1], [0], [0], [1], [0, 0, 1, 1], [], []>} : vector<8x128xf32>, vector<128x128xf32>, vector<8x128xf32> -> vector<8x128xf32>
    %12 = arith.addf %9, %11 : vector<8x128xf32>
    %c0_6 = arith.constant 0 : index
    %c0_7 = arith.constant 0 : index
    %13 = vector.load %arg4[%c0_6, %c0_7] : memref<8x128xf32, #tpu.memory_space<vmem>>, vector<8x128xf32>
    tpu.vector_store %arg4[%c0_6, %c0_7], %12 {strides = array<i32>} : memref<8x128xf32, #tpu.memory_space<vmem>>, vector<8x128xf32>,
    return
  }
  func.func @transform_0(%arg0: i32, %arg1: i32) -> (i32, i32) {
    %c0_i32 = arith.constant 0 : i32
    %c0_i32_0 = arith.constant 0 : i32
    return %c0_i32, %arg1 : i32, i32
  }
  func.func @transform_1(%arg0: i32, %arg1: i32) -> (i32, i32) {
    %c0_i32 = arith.constant 0 : i32
    return %arg1, %arg0 : i32, i32
  }
  func.func @transform_2(%arg0: i32, %arg1: i32) -> (i32, i32) {
    %c0_i32 = arith.constant 0 : i32
    %c0_i32_0 = arith.constant 0 : i32
    return %c0_i32, %arg0 : i32, i32
  }
}

module attributes {stable_mosaic.version = 11 : i64} {
  func.func @_mlp_head_kernel(%arg0: i32, %arg1: memref<8x128xf32, #tpu.memory_space<vmem>>, %arg2: memref<8x1xf32, #tpu.memory_space<vmem>>, %arg3: memref<128x128xf32, #tpu.memory_space<vmem>>, %arg4: memref<1x128xf32, #tpu.memory_space<vmem>>, %arg5: memref<128x128xf32, #tpu.memory_space<vmem>>, %arg6: memref<1x128xf32, #tpu.memory_space<vmem>>, %arg7: memref<8x128xf32, #tpu.memory_space<vmem>>) attributes {dimension_semantics = [#tpu.dimension_semantics<arbitrary>], iteration_bounds = array<i64: 1>, scalar_prefetch = 0 : i64, scratch_operands = 0 : i64, tpu.core_type = #tpu.core_type<tc>, window_params = [{pipeline_mode = #tpu.pipeline_mode<synchronous>, transform_indices = @transform_0, window_bounds = array<i64: 8, 128>}, {pipeline_mode = #tpu.pipeline_mode<synchronous>, transform_indices = @transform_1, window_bounds = array<i64: 8, 1>}, {pipeline_mode = #tpu.pipeline_mode<synchronous>, transform_indices = @transform_2, window_bounds = array<i64: 128, 128>}, {pipeline_mode = #tpu.pipeline_mode<synchronous>, transform_indices = @transform_3, window_bounds = array<i64: 1, 128>}, {pipeline_mode = #tpu.pipeline_mode<synchronous>, transform_indices = @transform_4, window_bounds = array<i64: 128, 128>}, {pipeline_mode = #tpu.pipeline_mode<synchronous>, transform_indices = @transform_5, window_bounds = array<i64: 1, 128>}, {pipeline_mode = #tpu.pipeline_mode<synchronous>, transform_indices = @transform_6, window_bounds = array<i64: 8, 128>}]} {
    %c0 = arith.constant 0 : index
    %c0_0 = arith.constant 0 : index
    %0 = vector.load %arg1[%c0, %c0_0] : memref<8x128xf32, #tpu.memory_space<vmem>>, vector<8x128xf32>
    %c0_1 = arith.constant 0 : index
    %c0_2 = arith.constant 0 : index
    %1 = vector.load %arg2[%c0_1, %c0_2] : memref<8x1xf32, #tpu.memory_space<vmem>>, vector<8x1xf32>
    %2 = vector.broadcast %1 : vector<8x1xf32> to vector<8x128xf32>
    %3 = arith.mulf %0, %2 : vector<8x128xf32>
    %c0_3 = arith.constant 0 : index
    %c0_4 = arith.constant 0 : index
    %4 = vector.load %arg3[%c0_3, %c0_4] : memref<128x128xf32, #tpu.memory_space<vmem>>, vector<128x128xf32>
    %cst = arith.constant dense<0.000000e+00> : vector<8x128xf32>
    %5 = tpu.matmul %3, %4, %cst {dimension_numbers = #tpu.dot_dimension_numbers<[1], [0], [0], [1], [0, 0, 1, 1], [], []>} : vector<8x128xf32>, vector<128x128xf32>, vector<8x128xf32> -> vector<8x128xf32>
    %c0_5 = arith.constant 0 : index
    %c0_6 = arith.constant 0 : index
    %6 = vector.load %arg4[%c0_5, %c0_6] : memref<1x128xf32, #tpu.memory_space<vmem>>, vector<1x128xf32>
    %7 = vector.broadcast %6 : vector<1x128xf32> to vector<8x128xf32>
    %8 = arith.addf %5, %7 : vector<8x128xf32>
    %cst_7 = arith.constant 0.000000e+00 : f32
    %9 = vector.broadcast %cst_7 : f32 to vector<8x128xf32>
    %10 = arith.maximumf %8, %9 : vector<8x128xf32>
    %c0_8 = arith.constant 0 : index
    %c0_9 = arith.constant 0 : index
    %11 = vector.load %arg5[%c0_8, %c0_9] : memref<128x128xf32, #tpu.memory_space<vmem>>, vector<128x128xf32>
    %cst_10 = arith.constant dense<0.000000e+00> : vector<8x128xf32>
    %12 = tpu.matmul %10, %11, %cst_10 {dimension_numbers = #tpu.dot_dimension_numbers<[1], [0], [0], [1], [0, 0, 1, 1], [], []>} : vector<8x128xf32>, vector<128x128xf32>, vector<8x128xf32> -> vector<8x128xf32>
    %c0_11 = arith.constant 0 : index
    %c0_12 = arith.constant 0 : index
    %13 = vector.load %arg6[%c0_11, %c0_12] : memref<1x128xf32, #tpu.memory_space<vmem>>, vector<1x128xf32>
    %14 = vector.broadcast %13 : vector<1x128xf32> to vector<8x128xf32>
    %15 = arith.addf %12, %14 : vector<8x128xf32>
    %c0_13 = arith.constant 0 : index
    %c0_14 = arith.constant 0 : index
    %16 = vector.load %arg7[%c0_13, %c0_14] : memref<8x128xf32, #tpu.memory_space<vmem>>, vector<8x128xf32>
    tpu.vector_store %arg7[%c0_13, %c0_14], %15 {strides = array<i32>} : memref<8x128xf32, #tpu.memory_space<vmem>>, vector<8x128xf32>,
    return
  }
  func.func @transform_0(%arg0: i32) -> (i32, i32) {
    %c0_i32 = arith.constant 0 : i32
    %c0_i32_0 = arith.constant 0 : i32
    %c0_i32_1 = arith.constant 0 : i32
    return %c0_i32, %c0_i32_0 : i32, i32
  }
  func.func @transform_1(%arg0: i32) -> (i32, i32) {
    %c0_i32 = arith.constant 0 : i32
    %c0_i32_0 = arith.constant 0 : i32
    %c0_i32_1 = arith.constant 0 : i32
    return %c0_i32, %c0_i32_0 : i32, i32
  }
  func.func @transform_2(%arg0: i32) -> (i32, i32) {
    %c0_i32 = arith.constant 0 : i32
    %c0_i32_0 = arith.constant 0 : i32
    %c0_i32_1 = arith.constant 0 : i32
    return %c0_i32, %c0_i32_0 : i32, i32
  }
  func.func @transform_3(%arg0: i32) -> (i32, i32) {
    %c0_i32 = arith.constant 0 : i32
    %c0_i32_0 = arith.constant 0 : i32
    %c0_i32_1 = arith.constant 0 : i32
    return %c0_i32, %c0_i32_0 : i32, i32
  }
  func.func @transform_4(%arg0: i32) -> (i32, i32) {
    %c0_i32 = arith.constant 0 : i32
    %c0_i32_0 = arith.constant 0 : i32
    %c0_i32_1 = arith.constant 0 : i32
    return %c0_i32, %c0_i32_0 : i32, i32
  }
  func.func @transform_5(%arg0: i32) -> (i32, i32) {
    %c0_i32 = arith.constant 0 : i32
    %c0_i32_0 = arith.constant 0 : i32
    %c0_i32_1 = arith.constant 0 : i32
    return %c0_i32, %c0_i32_0 : i32, i32
  }
  func.func @transform_6(%arg0: i32) -> (i32, i32) {
    %c0_i32 = arith.constant 0 : i32
    %c0_i32_0 = arith.constant 0 : i32
    %c0_i32_1 = arith.constant 0 : i32
    return %c0_i32, %c0_i32_0 : i32, i32
  }
}

</mosaic_0001>

<llo_original>
// kernel: sact_head_forward.2
$region0: #{sact_head_forward.2}
  #allocation0 [shape = 'u32[]', space=smem, size = 0x4, offset = 0x4, fixed_abs, tag = 'smem constant byte address 0x4 - core index']
  #allocation1 [shape = 'u32[144,128]{1,0:T(1,128)}', space=vmem, size = 0x12000, scoped, tag = 'internal scratch']
  %s0 = inlined_call_operand.vmem [shape: s32[1,128], index: 0, kind: input, shape index: {}]
  %s1 = inlined_call_operand.vmem [shape: f32[128,128], index: 1, kind: input, shape index: {}]
  %s2 = inlined_call_operand.vmem [shape: f32[8,128], index: 2, kind: output, shape index: {}]
  %s3 = sld [smem:[#allocation0]]
  $region22: #{sact_head_forward.2} parent=0
    _
  %s5 = ssub.s32 1, %s3
  %s6 = scalar_select 0, %s5, %s3
  // Predicated region
  $region2: #{sact_head_forward.2} parent=0 // pred_check
    _
  $region3: #{sact_head_forward.2} parent=0 // pred_check_branch
    %8 = sbr.rel (0) target = $region5
  $region4: #{sact_head_forward.2} parent=0 // pred_region
    _
  $region5: #{sact_head_forward.2} parent=0 // pred_fallthru
    _
  // Predicated region
  $region6: #{sact_head_forward.2} parent=0 // pred_check
    _
  $region7: #{sact_head_forward.2} parent=0 // pred_check_branch
    %10 = sbr.rel (0) target = $region9
  $region8: #{sact_head_forward.2} parent=0 // pred_region
    _
  $region9: #{sact_head_forward.2} parent=0 // pred_fallthru
    _
  %p11 = scmp.eq.s32.totalorder 0, 0
  // Predicated region
  $region10: #{sact_head_forward.2} parent=0 // pred_check
    %p12 = pneg %p11
  $region11: #{sact_head_forward.2} parent=0 // pred_check_branch
    %14 = sbr.rel (%p12) target = $region13
  $region12: #{sact_head_forward.2} parent=0 // pred_region
    %15 = vst [vmem:[%s2] sm:$0xff] 0.0
  $region13: #{sact_head_forward.2} parent=0 // pred_fallthru
    _
  %v16 = vld [vmem:[%s0] sm:$0x1]
  %v17 = vlaneseq
  %v18 = vshrl.u32 %v17, 7
  %v19 = vlaneseq
  %v20 = vshrl.u32 %v19, 7
  %v21 = vsub.s32 0, %v20
  %v22 = vrot.slane %v16, %v21
  %vm23 = vcmp.eq.s32.totalorder %v18, %v22
  %v24 = vsel %vm23, 1, 0
  %v25 = vcvt.s32.f32 %v24
  %v26 = vld [vmem:[%s2] sm:$0xff]
  %v27 = vld [vmem:[%s1] sm:$0xff]
  %v28 = vld [vmem:[%s1 + $0x8] sm:$0xff]
  %v29 = vld [vmem:[%s1 + $0x10] sm:$0xff]
  %v30 = vld [vmem:[%s1 + $0x18] sm:$0xff]
  %v31 = vld [vmem:[%s1 + $0x20] sm:$0xff]
  %v32 = vld [vmem:[%s1 + $0x28] sm:$0xff]
  %v33 = vld [vmem:[%s1 + $0x30] sm:$0xff]
  %v34 = vld [vmem:[%s1 + $0x38] sm:$0xff]
  %v35 = vld [vmem:[%s1 + $0x40] sm:$0xff]
  %v36 = vld [vmem:[%s1 + $0x48] sm:$0xff]
  %v37 = vld [vmem:[%s1 + $0x50] sm:$0xff]
  %v38 = vld [vmem:[%s1 + $0x58] sm:$0xff]
  %v39 = vld [vmem:[%s1 + $0x60] sm:$0xff]
  %v40 = vld [vmem:[%s1 + $0x68] sm:$0xff]
  %v41 = vld [vmem:[%s1 + $0x70] sm:$0xff]
  %v42 = vld [vmem:[%s1 + $0x78] sm:$0xff]
  %43 = vmatprep.subr.mxu0 0.0
  %44 = vmatpush1.msra.mxu0 %v27
  %45 = vmatprep.subr.mxu0 0.0
  %46 = vmatpush1.msra.mxu0 %v28
  %47 = vmatprep.subr.mxu0 0.0
  %48 = vmatpush1.msra.mxu0 %v29
  %49 = vmatprep.subr.mxu0 0.0
  %50 = vmatpush1.msra.mxu0 %v30
  %51 = vmatprep.subr.mxu0 0.0
  %52 = vmatpush1.msra.mxu0 %v31
  %53 = vmatprep.subr.mxu0 0.0
  %54 = vmatpush1.msra.mxu0 %v32
  %55 = vmatprep.subr.mxu0 0.0
  %56 = vmatpush1.msra.mxu0 %v33
  %57 = vmatprep.subr.mxu0 0.0
  %58 = vmatpush1.msra.mxu0 %v34
  %59 = vmatprep.subr.mxu0 0.0
  %60 = vmatpush1.msra.mxu0 %v35
  %61 = vmatprep.subr.mxu0 0.0
  %62 = vmatpush1.msra.mxu0 %v36
  %63 = vmatprep.subr.mxu0 0.0
  %64 = vmatpush1.msra.mxu0 %v37
  %65 = vmatprep.subr.mxu0 0.0
  %66 = vmatpush1.msra.mxu0 %v38
  %67 = vmatprep.subr.mxu0 0.0
  %68 = vmatpush1.msra.mxu0 %v39
  %69 = vmatprep.subr.mxu0 0.0
  %70 = vmatpush1.msra.mxu0 %v40
  %71 = vmatprep.subr.mxu0 0.0
  %72 = vmatpush1.msra.mxu0 %v41
  %73 = vmatprep.subr.mxu0 0.0
  %74 = vmatpush1.msra.mxu0 %v42
  %75 = vmatprep.subr.mxu0 0.0
  %76 = vmatpush1.msra.mxu0 0.0
  %77 = vmatprep.subr.mxu0 0.0
  %78 = vmatpush1.msra.mxu0 0.0
  %79 = vmatprep.subr.mxu0 0.0
  %80 = vmatpush1.msra.mxu0 0.0
  %81 = vmatprep.subr.mxu0 0.0
  %82 = vmatpush1.msra.mxu0 0.0
  %83 = vmatprep.subr.mxu0 0.0
  %84 = vmatpush1.msra.mxu0 0.0
  %85 = vmatprep.subr.mxu0 0.0
  %86 = vmatpush1.msra.mxu0 0.0
  %87 = vmatprep.subr.mxu0 0.0
  %88 = vmatpush1.msra.mxu0 0.0
  %89 = vmatprep.subr.mxu0 0.0
  %90 = vmatpush1.msra.mxu0 0.0
  %91 = vmatprep.subr.mxu0 0.0
  %92 = vmatpush1.msra.mxu0 0.0
  %93 = vmatprep.subr.mxu0 0.0
  %94 = vmatpush1.msra.mxu0 0.0
  %95 = vmatprep.subr.mxu0 0.0
  %96 = vmatpush1.msra.mxu0 0.0
  %97 = vmatprep.subr.mxu0 0.0
  %98 = vmatpush1.msra.mxu0 0.0
  %99 = vmatprep.subr.mxu0 0.0
  %100 = vmatpush1.msra.mxu0 0.0
  %101 = vmatprep.subr.mxu0 0.0
  %102 = vmatpush1.msra.mxu0 0.0
  %103 = vmatprep.subr.mxu0 0.0
  %104 = vmatpush1.msra.mxu0 0.0
  %105 = vmatprep.subr.mxu0 0.0
  %106 = vmatpush1.msra.mxu0 0.0
  %107 = vmatprep.mubr.f32.mxu0 0.0
  %108 = vmatmul.mubr.f32.gmra.mrb[0].mxu0 %v25
  %v109 = vpop.f32.mrb[0].mxu0
  %v110 = vadd.f32 0.0, %v109
  %v111 = vpop.f32.mrb[0].mxu0
  %112 = vdwg.mxu0
  %v113 = vadd.f32 %v26, %v110
  %114 = vst [vmem:[%s2] sm:$0xff] %v113
  // Predicated region
  $region14: #{sact_head_forward.2} parent=0 // pred_check
    _
  $region15: #{sact_head_forward.2} parent=0 // pred_check_branch
    %116 = sbr.rel (0) target = $region17
  $region16: #{sact_head_forward.2} parent=0 // pred_region
    _
  $region17: #{sact_head_forward.2} parent=0 // pred_fallthru
    _
  // Predicated region
  $region18: #{sact_head_forward.2} parent=0 // pred_check
    _
  $region19: #{sact_head_forward.2} parent=0 // pred_check_branch
    %118 = sbr.rel (0) target = $region21
  $region20: #{sact_head_forward.2} parent=0 // pred_region
    _
  $region21: #{sact_head_forward.2} parent=0 // pred_fallthru
    _

// kernel: sact_head_forward.3
$region0: #{sact_head_forward.3}
  #allocation0 [shape = 'u32[]', space=smem, size = 0x4, offset = 0x4, fixed_abs, tag = 'smem constant byte address 0x4 - core index']
  #allocation1 [shape = 'u32[144,128]{1,0:T(1,128)}', space=vmem, size = 0x12000, scoped, tag = 'internal scratch']
  %s0 = inlined_call_operand.vmem [shape: f32[8,128], index: 0, kind: input, shape index: {}]
  %s1 = inlined_call_operand.vmem [shape: f32[8,1], index: 1, kind: input, shape index: {}]
  %s2 = inlined_call_operand.vmem [shape: f32[128,128], index: 2, kind: input, shape index: {}]
  %s3 = inlined_call_operand.vmem [shape: f32[1,128], index: 3, kind: input, shape index: {}]
  %s4 = inlined_call_operand.vmem [shape: f32[128,128], index: 4, kind: input, shape index: {}]
  %s5 = inlined_call_operand.vmem [shape: f32[1,128], index: 5, kind: input, shape index: {}]
  %s6 = inlined_call_operand.vmem [shape: f32[8,128], index: 6, kind: output, shape index: {}]
  %s7 = sld [smem:[#allocation0]]
  $region34: #{sact_head_forward.3} parent=0
    _
  %s9 = ssub.s32 1, %s7
  %s10 = scalar_select 0, %s9, %s7
  // Predicated region
  $region2: #{sact_head_forward.3} parent=0 // pred_check
    _
  $region3: #{sact_head_forward.3} parent=0 // pred_check_branch
    %12 = sbr.rel (0) target = $region5
  $region4: #{sact_head_forward.3} parent=0 // pred_region
    _
  $region5: #{sact_head_forward.3} parent=0 // pred_fallthru
    _
  // Predicated region
  $region6: #{sact_head_forward.3} parent=0 // pred_check
    _
  $region7: #{sact_head_forward.3} parent=0 // pred_check_branch
    %14 = sbr.rel (0) target = $region9
  $region8: #{sact_head_forward.3} parent=0 // pred_region
    _
  $region9: #{sact_head_forward.3} parent=0 // pred_fallthru
    _
  // Predicated region
  $region10: #{sact_head_forward.3} parent=0 // pred_check
    _
  $region11: #{sact_head_forward.3} parent=0 // pred_check_branch
    %16 = sbr.rel (0) target = $region13
  $region12: #{sact_head_forward.3} parent=0 // pred_region
    _
  $region13: #{sact_head_forward.3} parent=0 // pred_fallthru
    _
  // Predicated region
  $region14: #{sact_head_forward.3} parent=0 // pred_check
    _
  $region15: #{sact_head_forward.3} parent=0 // pred_check_branch
    %18 = sbr.rel (0) target = $region17
  $region16: #{sact_head_forward.3} parent=0 // pred_region
    _
  $region17: #{sact_head_forward.3} parent=0 // pred_fallthru
    _
  // Predicated region
  $region18: #{sact_head_forward.3} parent=0 // pred_check
    _
  $region19: #{sact_head_forward.3} parent=0 // pred_check_branch
    %20 = sbr.rel (0) target = $region21
  $region20: #{sact_head_forward.3} parent=0 // pred_region
    _
  $region21: #{sact_head_forward.3} parent=0 // pred_fallthru
    _
  // Predicated region
  $region22: #{sact_head_forward.3} parent=0 // pred_check
    _
  $region23: #{sact_head_forward.3} parent=0 // pred_check_branch
    %22 = sbr.rel (0) target = $region25
  $region24: #{sact_head_forward.3} parent=0 // pred_region
    _
  $region25: #{sact_head_forward.3} parent=0 // pred_fallthru
    _
  %v23 = vld [vmem:[%s0] sm:$0xff]
  %v24 = vld [vmem:[%s1] sm:$0xff]
  %26 = vset.pattern.permute.xlu0 0
  %27 = vperm.xlu0 %26, %v24
  %v28 = vpop.permute.xlu0 %27
  %v30 = vmul.f32 %v23, %v28
  %v31 = vld [vmem:[%s2] sm:$0xff]
  %v32 = vld [vmem:[%s2 + $0x8] sm:$0xff]
  %v33 = vld [vmem:[%s2 + $0x10] sm:$0xff]
  %v34 = vld [vmem:[%s2 + $0x18] sm:$0xff]
  %v35 = vld [vmem:[%s2 + $0x20] sm:$0xff]
  %v36 = vld [vmem:[%s2 + $0x28] sm:$0xff]
  %v37 = vld [vmem:[%s2 + $0x30] sm:$0xff]
  %v38 = vld [vmem:[%s2 + $0x38] sm:$0xff]
  %v39 = vld [vmem:[%s2 + $0x40] sm:$0xff]
  %v40 = vld [vmem:[%s2 + $0x48] sm:$0xff]
  %v41 = vld [vmem:[%s2 + $0x50] sm:$0xff]
  %v42 = vld [vmem:[%s2 + $0x58] sm:$0xff]
  %v43 = vld [vmem:[%s2 + $0x60] sm:$0xff]
  %v44 = vld [vmem:[%s2 + $0x68] sm:$0xff]
  %v45 = vld [vmem:[%s2 + $0x70] sm:$0xff]
  %v46 = vld [vmem:[%s2 + $0x78] sm:$0xff]
  %v47 = vld [vmem:[%s3] sm:$0x1]
  %v49 = vlaneseq
  %v50 = vshrl.u32 %v49, 7
  %v51 = vsub.s32 0, %v50
  %v52 = vrot.slane %v47, %v51
  %54 = vmatprep.subr.mxu0 0.0
  %55 = vmatpush1.msra.mxu0 %v31
  %56 = vmatprep.subr.mxu0 0.0
  %57 = vmatpush1.msra.mxu0 %v32
  %58 = vmatprep.subr.mxu0 0.0
  %59 = vmatpush1.msra.mxu0 %v33
  %60 = vmatprep.subr.mxu0 0.0
  %61 = vmatpush1.msra.mxu0 %v34
  %62 = vmatprep.subr.mxu0 0.0
  %63 = vmatpush1.msra.mxu0 %v35
  %64 = vmatprep.subr.mxu0 0.0
  %65 = vmatpush1.msra.mxu0 %v36
  %66 = vmatprep.subr.mxu0 0.0
  %67 = vmatpush1.msra.mxu0 %v37
  %68 = vmatprep.subr.mxu0 0.0
  %69 = vmatpush1.msra.mxu0 %v38
  %70 = vmatprep.subr.mxu0 0.0
  %71 = vmatpush1.msra.mxu0 %v39
  %72 = vmatprep.subr.mxu0 0.0
  %73 = vmatpush1.msra.mxu0 %v40
  %74 = vmatprep.subr.mxu0 0.0
  %75 = vmatpush1.msra.mxu0 %v41
  %76 = vmatprep.subr.mxu0 0.0
  %77 = vmatpush1.msra.mxu0 %v42
  %78 = vmatprep.subr.mxu0 0.0
  %79 = vmatpush1.msra.mxu0 %v43
  %80 = vmatprep.subr.mxu0 0.0
  %81 = vmatpush1.msra.mxu0 %v44
  %82 = vmatprep.subr.mxu0 0.0
  %83 = vmatpush1.msra.mxu0 %v45
  %84 = vmatprep.subr.mxu0 0.0
  %85 = vmatpush1.msra.mxu0 %v46
  %86 = vmatprep.subr.mxu0 0.0
  %87 = vmatpush1.msra.mxu0 0.0
  %88 = vmatprep.subr.mxu0 0.0
  %89 = vmatpush1.msra.mxu0 0.0
  %90 = vmatprep.subr.mxu0 0.0
  %91 = vmatpush1.msra.mxu0 0.0
  %92 = vmatprep.subr.mxu0 0.0
  %93 = vmatpush1.msra.mxu0 0.0
  %94 = vmatprep.subr.mxu0 0.0
  %95 = vmatpush1.msra.mxu0 0.0
  %96 = vmatprep.subr.mxu0 0.0
  %97 = vmatpush1.msra.mxu0 0.0
  %98 = vmatprep.subr.mxu0 0.0
  %99 = vmatpush1.msra.mxu0 0.0
  %100 = vmatprep.subr.mxu0 0.0
  %101 = vmatpush1.msra.mxu0 0.0
  %102 = vmatprep.subr.mxu0 0.0
  %103 = vmatpush1.msra.mxu0 0.0
  %104 = vmatprep.subr.mxu0 0.0
  %105 = vmatpush1.msra.mxu0 0.0
  %106 = vmatprep.subr.mxu0 0.0
  %107 = vmatpush1.msra.mxu0 0.0
  %108 = vmatprep.subr.mxu0 0.0
  %109 = vmatpush1.msra.mxu0 0.0
  %110 = vmatprep.subr.mxu0 0.0
  %111 = vmatpush1.msra.mxu0 0.0
  %112 = vmatprep.subr.mxu0 0.0
  %113 = vmatpush1.msra.mxu0 0.0
  %114 = vmatprep.subr.mxu0 0.0
  %115 = vmatpush1.msra.mxu0 0.0
  %116 = vmatprep.subr.mxu0 0.0
  %117 = vmatpush1.msra.mxu0 0.0
  %118 = vmatprep.mubr.f32.mxu0 0.0
  %119 = vmatmul.mubr.f32.gmra.mrb[0].mxu0 %v30
  %v120 = vpop.f32.mrb[0].mxu0
  %v121 = vadd.f32 %v52, %v120
  %v122 = vpop.f32.mrb[0].mxu0
  %123 = vdwg.mxu0
  %v124 = vmax.f32 %v121, 0.0
  %v125 = vld [vmem:[%s4] sm:$0xff]
  %v126 = vld [vmem:[%s4 + $0x8] sm:$0xff]
  %v127 = vld [vmem:[%s4 + $0x10] sm:$0xff]
  %v128 = vld [vmem:[%s4 + $0x18] sm:$0xff]
  %v129 = vld [vmem:[%s4 + $0x20] sm:$0xff]
  %v130 = vld [vmem:[%s4 + $0x28] sm:$0xff]
  %v131 = vld [vmem:[%s4 + $0x30] sm:$0xff]
  %v132 = vld [vmem:[%s4 + $0x38] sm:$0xff]
  %v133 = vld [vmem:[%s4 + $0x40] sm:$0xff]
  %v134 = vld [vmem:[%s4 + $0x48] sm:$0xff]
  %v135 = vld [vmem:[%s4 + $0x50] sm:$0xff]
  %v136 = vld [vmem:[%s4 + $0x58] sm:$0xff]
  %v137 = vld [vmem:[%s4 + $0x60] sm:$0xff]
  %v138 = vld [vmem:[%s4 + $0x68] sm:$0xff]
  %v139 = vld [vmem:[%s4 + $0x70] sm:$0xff]
  %v140 = vld [vmem:[%s4 + $0x78] sm:$0xff]
  %v141 = vld [vmem:[%s5] sm:$0x1]
  %v143 = vlaneseq
  %v144 = vshrl.u32 %v143, 7
  %v145 = vsub.s32 0, %v144
  %v146 = vrot.slane %v141, %v145
  %148 = vmatprep.subr.mxu0 0.0
  %149 = vmatpush1.msra.mxu0 %v125
  %150 = vmatprep.subr.mxu0 0.0
  %151 = vmatpush1.msra.mxu0 %v126
  %152 = vmatprep.subr.mxu0 0.0
  %153 = vmatpush1.msra.mxu0 %v127
  %154 = vmatprep.subr.mxu0 0.0
  %155 = vmatpush1.msra.mxu0 %v128
  %156 = vmatprep.subr.mxu0 0.0
  %157 = vmatpush1.msra.mxu0 %v129
  %158 = vmatprep.subr.mxu0 0.0
  %159 = vmatpush1.msra.mxu0 %v130
  %160 = vmatprep.subr.mxu0 0.0
  %161 = vmatpush1.msra.mxu0 %v131
  %162 = vmatprep.subr.mxu0 0.0
  %163 = vmatpush1.msra.mxu0 %v132
  %164 = vmatprep.subr.mxu0 0.0
  %165 = vmatpush1.msra.mxu0 %v133
  %166 = vmatprep.subr.mxu0 0.0
  %167 = vmatpush1.msra.mxu0 %v134
  %168 = vmatprep.subr.mxu0 0.0
  %169 = vmatpush1.msra.mxu0 %v135
  %170 = vmatprep.subr.mxu0 0.0
  %171 = vmatpush1.msra.mxu0 %v136
  %172 = vmatprep.subr.mxu0 0.0
  %173 = vmatpush1.msra.mxu0 %v137
  %174 = vmatprep.subr.mxu0 0.0
  %175 = vmatpush1.msra.mxu0 %v138
  %176 = vmatprep.subr.mxu0 0.0
  %177 = vmatpush1.msra.mxu0 %v139
  %178 = vmatprep.subr.mxu0 0.0
  %179 = vmatpush1.msra.mxu0 %v140
  %180 = vmatprep.subr.mxu0 0.0
  %181 = vmatpush1.msra.mxu0 0.0
  %182 = vmatprep.subr.mxu0 0.0
  %183 = vmatpush1.msra.mxu0 0.0
  %184 = vmatprep.subr.mxu0 0.0
  %185 = vmatpush1.msra.mxu0 0.0
  %186 = vmatprep.subr.mxu0 0.0
  %187 = vmatpush1.msra.mxu0 0.0
  %188 = vmatprep.subr.mxu0 0.0
  %189 = vmatpush1.msra.mxu0 0.0
  %190 = vmatprep.subr.mxu0 0.0
  %191 = vmatpush1.msra.mxu0 0.0
  %192 = vmatprep.subr.mxu0 0.0
  %193 = vmatpush1.msra.mxu0 0.0
  %194 = vmatprep.subr.mxu0 0.0
  %195 = vmatpush1.msra.mxu0 0.0
  %196 = vmatprep.subr.mxu0 0.0
  %197 = vmatpush1.msra.mxu0 0.0
  %198 = vmatprep.subr.mxu0 0.0
  %199 = vmatpush1.msra.mxu0 0.0
  %200 = vmatprep.subr.mxu0 0.0
  %201 = vmatpush1.msra.mxu0 0.0
  %202 = vmatprep.subr.mxu0 0.0
  %203 = vmatpush1.msra.mxu0 0.0
  %204 = vmatprep.subr.mxu0 0.0
  %205 = vmatpush1.msra.mxu0 0.0
  %206 = vmatprep.subr.mxu0 0.0
  %207 = vmatpush1.msra.mxu0 0.0
  %208 = vmatprep.subr.mxu0 0.0
  %209 = vmatpush1.msra.mxu0 0.0
  %210 = vmatprep.subr.mxu0 0.0
  %211 = vmatpush1.msra.mxu0 0.0
  %212 = vmatprep.mubr.f32.mxu0 0.0
  %213 = vmatmul.mubr.f32.gmra.mrb[0].mxu0 %v124
  %v214 = vpop.f32.mrb[0].mxu0
  %v215 = vadd.f32 %v146, %v214
  %v216 = vpop.f32.mrb[0].mxu0
  %217 = vdwg.mxu0
  %218 = vst [vmem:[%s6] sm:$0xff] %v215
  // Predicated region
  $region26: #{sact_head_forward.3} parent=0 // pred_check
    _
  $region27: #{sact_head_forward.3} parent=0 // pred_check_branch
    %220 = sbr.rel (0) target = $region29
  $region28: #{sact_head_forward.3} parent=0 // pred_region
    _
  $region29: #{sact_head_forward.3} parent=0 // pred_fallthru
    _
  // Predicated region
  $region30: #{sact_head_forward.3} parent=0 // pred_check
    _
  $region31: #{sact_head_forward.3} parent=0 // pred_check_branch
    %222 = sbr.rel (0) target = $region33
  $region32: #{sact_head_forward.3} parent=0 // pred_region
    _
  $region33: #{sact_head_forward.3} parent=0 // pred_fallthru
    _

</llo_original>
